<compile_context>
chip_gen: v5e
topology: v5e:2x2
jax: 0.10.0
libtpu: 0.0.40
codegen_flags: <defaults>
</compile_context>

<pallas_src>
import functools

import jax
import jax.numpy as jnp
import numpy as np
from jax.experimental import pallas as pl
from jax.experimental.pallas import tpu as pltpu


# ---------------------------------------------------------------------------
# helpers
# ---------------------------------------------------------------------------
def _round_up(x, m):
    return ((x + m - 1) // m) * m


def _pad_axis(x, axis, new_size):
    pad = new_size - x.shape[axis]
    if pad <= 0:
        return x
    widths = [(0, 0)] * x.ndim
    widths[axis] = (0, pad)
    return jnp.pad(x, widths)


@functools.lru_cache(maxsize=1)
def _vmem_limit_bytes():
    """Generation-aware scoped-VMEM limit (~96 MiB v5e/v6e, ~48 MiB v7x)."""
    try:
        cap = int(pltpu.get_tpu_info().vmem_capacity_bytes)
    except Exception:
        cap = 64 * 1024 * 1024
    return int(max(min(cap * 3 // 4, 96 * 1024 * 1024), 16 * 1024 * 1024))


def _flatten_head_input(vs, frameaxis_data, concat_frameaxis):
    if concat_frameaxis:
        vs = jnp.concatenate([vs, frameaxis_data], axis=-1)
    return vs.reshape(vs.shape[0], -1)       # nn.Flatten(start_dim=1)


# ---------------------------------------------------------------------------
# Kernel 1: all four masked means (+ y_hat_u) in one pass.
#   blocks: d_p/d_a0/d_a1 (Bt, S*A, C), d_fx (Bt, S, C) -> five (Bt, C) outputs
#   rows whose |x| row-sum is exactly zero are excluded; denominator is
#   clamped to >= 1 (matches torch.clamp(..., min=1)).  Exact division.
# ---------------------------------------------------------------------------
def _masked_means_kernel(p_ref, a0_ref, a1_ref, fx_ref,
                         p_o, a0_o, a1_o, fx_o, u_o):
    def mm(x):
        mask = (jnp.sum(jnp.abs(x), axis=-1) != 0).astype(jnp.float32)   # (Bt, N)
        num = jnp.sum(x * mask[..., None], axis=1)                       # (Bt, C)
        den = jnp.maximum(jnp.sum(mask, axis=1, keepdims=True), 1.0)     # (Bt, 1)
        return num / den                                                 # exact

    p = mm(p_ref[...])
    a0 = mm(a0_ref[...])
    a1 = mm(a1_ref[...])
    fx = mm(fx_ref[...])
    p_o[...] = p
    a0_o[...] = a0
    a1_o[...] = a1
    fx_o[...] = fx
    u_o[...] = (p + a0 + a1 + fx) * 0.25


def masked_means(d_p, d_a0, d_a1, d_fx, *, row_target=256):
    """d_p/d_a0/d_a1: (B, S*A, C), d_fx: (B, S, C) f32 ->
       (p_mean, a0_mean, a1_mean, fx_mean, y_hat_u), each (B, C) f32."""
    B, SA, C = d_p.shape
    S = d_fx.shape[1]
    vmem = _vmem_limit_bytes()

    per_row_bytes = (3 * SA + S) * C * 4                 # f32 input bytes per row
    cap = max((vmem // 2) // max(2 * per_row_bytes, 1), 8)
    bt = min(row_target, cap)
    if B <= bt:                                          # single block, no padding
        Bp, bt = B, B
    else:
        bt = max((bt // 8) * 8, 8)
        Bp = _round_up(B, bt)
        d_p = _pad_axis(d_p, 0, Bp)
        d_a0 = _pad_axis(d_a0, 0, Bp)
        d_a1 = _pad_axis(d_a1, 0, Bp)
        d_fx = _pad_axis(d_fx, 0, Bp)

    mean_shape = jax.ShapeDtypeStruct((Bp, C), jnp.float32)
    out = pl.pallas_call(
        _masked_means_kernel,
        out_shape=(mean_shape,) * 5,
        grid_spec=pltpu.PrefetchScalarGridSpec(
            num_scalar_prefetch=0,
            grid=(Bp // bt,),
            in_specs=[
                pl.BlockSpec((bt, SA, C), lambda i: (i, 0, 0)),
                pl.BlockSpec((bt, SA, C), lambda i: (i, 0, 0)),
                pl.BlockSpec((bt, SA, C), lambda i: (i, 0, 0)),
                pl.BlockSpec((bt, S, C), lambda i: (i, 0, 0)),
            ],
            out_specs=[pl.BlockSpec((bt, C), lambda i: (i, 0))] * 5,
        ),
        compiler_params=pltpu.CompilerParams(
            dimension_semantics=("parallel",),
            vmem_limit_bytes=vmem),
    )(d_p, d_a0, d_a1, d_fx)
    return tuple(o[:B] for o in out)


# ---------------------------------------------------------------------------
# Kernel 2a: fully fused feed-forward head (single pallas_call).
#   All folded bf16 weights + biases live in VMEM; the activation never
#   round-trips HBM between layers.  Used whenever the weights fit.
# ---------------------------------------------------------------------------
def _fused_head_kernel(*refs, relu_flags):
    x_ref = refs[0]
    out_ref = refs[-1]
    n = len(relu_flags)
    h = x_ref[...]                                       # (Bp, K0) bf16
    for l, relu in enumerate(relu_flags):
        w = refs[1 + 2 * l][...]
        b = refs[2 + 2 * l][...]
        acc = jnp.dot(h, w, preferred_element_type=jnp.float32) + b
        if relu:
            acc = jnp.maximum(acc, 0.0)
        if l < n - 1:
            h = acc.astype(jnp.bfloat16)
        else:
            out_ref[...] = acc                           # final layer, f32


def _head_fused(x, layers, vmem):
    Bp = x.shape[0]
    n_out = layers[-1][0].shape[1]
    flat = [x]
    relu_flags = []
    for (W, b, relu) in layers:
        flat += [W, b]
        relu_flags.append(relu)
    kernel = functools.partial(_fused_head_kernel, relu_flags=tuple(relu_flags))
    return pl.pallas_call(
        kernel,
        out_shape=jax.ShapeDtypeStruct((Bp, n_out), jnp.float32),
        compiler_params=pltpu.CompilerParams(vmem_limit_bytes=vmem),
    )(*flat)


# ---------------------------------------------------------------------------
# Kernel 2b: fallback — per-layer Linear (+ optional ReLU) with full-width
#   contiguous (tk, N) weight tiles streamed over K only.  grid = (K // tk,)
#   ("arbitrary"), f32 VMEM accumulator, Buffered(3) weight pipelining.
# ---------------------------------------------------------------------------
def _streamed_linear_kernel(x_ref, w_ref, b_ref, o_ref, acc_ref, *, apply_relu):
    k = pl.program_id(0)

    @pl.when(k == 0)
    def _():
        acc_ref[...] = jnp.zeros_like(acc_ref)

    acc_ref[...] += jnp.dot(x_ref[...], w_ref[...],
                            preferred_element_type=jnp.float32)

    @pl.when(k == pl.num_programs(0) - 1)
    def _():
        r = acc_ref[...] + b_ref[...]                    # bias (+ folded BN) in f32
        if apply_relu:
            r = jnp.maximum(r, 0.0)
        o_ref[...] = r.astype(o_ref.dtype)


def _pick_tile(dim, target):
    """Largest tile <= target that is a 256- (preferred) or 128-multiple and
    divides dim; falls back to the full dim (always legal)."""
    if dim <= target:
        return dim
    for q in (256, 128):
        t = (min(target, dim) // q) * q
        while t >= q:
            if dim % t == 0:
                return t
            t -= q
    return dim


def _weight_spec(tk, n, ksteps, buffering):
    idx = lambda k: (k, 0)
    if buffering > 2 and ksteps >= buffering:
        try:
            return pl.BlockSpec((tk, n), idx, pipeline_mode=pl.Buffered(buffering))
        except (TypeError, AttributeError):   # pipeline_mode unavailable
            pass
    return pl.BlockSpec((tk, n), idx)


def _linear_streamed(x, W, b, *, apply_relu, out_dtype, tk_target, vmem):
    """y = act(x @ W + b).  x: (Bp, K) bf16, W: (K, N) bf16, b: (1, N) f32."""
    Bp, K = x.shape
    N = W.shape[1]
    # keep ~4 in-flight bf16 weight buffers within half the VMEM budget
    max_tk = max(((vmem // 2) // max(4 * N * 2, 1)) // 128 * 128, 128)
    tk = _pick_tile(K, min(tk_target, max_tk))
    ksteps = K // tk
    kernel = functools.partial(_streamed_linear_kernel, apply_relu=apply_relu)
    # TODO(synk): on v7x (2 TensorCores) split N into >=2 "parallel" blocks so
    # both cores share the weight stream; single-N-tile keeps DMAs contiguous.
    return pl.pallas_call(
        kernel,
        out_shape=jax.ShapeDtypeStruct((Bp, N), out_dtype),
        grid_spec=pltpu.PrefetchScalarGridSpec(
            num_scalar_prefetch=0,
            grid=(ksteps,),
            in_specs=[
                pl.BlockSpec((Bp, tk), lambda k: (0, k)),
                _weight_spec(tk, N, ksteps, buffering=3),
                pl.BlockSpec((1, N), lambda k: (0, 0)),
            ],
            out_specs=pl.BlockSpec((Bp, N), lambda k: (0, 0)),
            scratch_shapes=[pltpu.VMEM((Bp, N), jnp.float32)],
        ),
        compiler_params=pltpu.CompilerParams(
            dimension_semantics=("arbitrary",),
            vmem_limit_bytes=vmem),
    )(x, W, b)


# ---------------------------------------------------------------------------
# Parameter init (deterministic, mirrors nn.Linear / nn.BatchNorm1d defaults)
# and one-time parameter preparation (BN fold + bf16 cast).
# ---------------------------------------------------------------------------
def init_params(key, embedding_dim, num_classes, frameaxis_dim, num_sentences,
                concat_frameaxis=True, num_layers=3):
    D_h = embedding_dim + (frameaxis_dim if concat_frameaxis else 0)
    input_dim = D_h * num_sentences
    in_outs = ([(input_dim, input_dim)] * num_layers
               + [(input_dim, embedding_dim), (embedding_dim, num_classes)])
    keys = jax.random.split(key, 2 * len(in_outs))
    linears = []
    for i, (fi, fo) in enumerate(in_outs):
        bound = float(fi) ** -0.5
        W = jax.random.uniform(keys[2 * i], (fi, fo), jnp.float32, -bound, bound)
        b = jax.random.uniform(keys[2 * i + 1], (1, fo), jnp.float32, -bound, bound)
        linears.append((W, b))
    bns = []
    for _ in range(num_layers):
        gamma = jnp.ones((input_dim,), jnp.float32)      # PyTorch BN defaults
        beta = jnp.zeros((input_dim,), jnp.float32)
        mean = jnp.zeros((input_dim,), jnp.float32)
        var = jnp.ones((input_dim,), jnp.float32)
        bns.append((gamma, beta, mean, var))
    return {"linears": linears, "bns": bns, "input_dim": input_dim}


def prepare_params(params, eps=1e-5):
    """Fold eval-mode BatchNorm into the preceding Linear and cast to bf16.
    Call ONCE outside the per-forward path (hoisted weight preprocessing)."""
    linears = params["linears"]
    bns = params["bns"]
    n_bn = len(bns)
    layers = []
    for l in range(n_bn):
        W, b = linears[l]
        gamma, beta, mean, var = bns[l]
        scale = gamma / jnp.sqrt(var + eps)
        shift = beta - mean * scale
        Wf = (W * scale[None, :]).astype(jnp.bfloat16)
        bf = (b * scale[None, :] + shift[None, :]).astype(jnp.float32)
        layers.append((Wf, bf, True))                    # Linear+BN+ReLU
    W4, b4 = linears[n_bn]
    layers.append((W4.astype(jnp.bfloat16), b4.astype(jnp.float32), True))
    W5, b5 = linears[n_bn + 1]
    layers.append((W5.astype(jnp.bfloat16), b5.astype(jnp.float32), False))
    return {"layers": layers}


# ---------------------------------------------------------------------------
# Forward wrapper
# ---------------------------------------------------------------------------
def slmuse_supervised_forward(prepared, d_p, d_a0, d_a1, d_fx, vs, frameaxis_data,
                              concat_frameaxis=True, head_mode="auto",
                              tk_target=2048):
    B, S, A, C = d_p.shape

    # ---- masked means + y_hat_u (single fused pallas_call, no staging copy)
    p_mean, a0_mean, a1_mean, fx_mean, y_hat_u = masked_means(
        d_p.reshape(B, S * A, C), d_a0.reshape(B, S * A, C),
        d_a1.reshape(B, S * A, C), d_fx)

    # ---- feed-forward head
    ws = _flatten_head_input(vs, frameaxis_data, concat_frameaxis)
    Bp = _round_up(B, 16)                                # bf16 row packing
    h = _pad_axis(ws, 0, Bp).astype(jnp.bfloat16)

    layers = prepared["layers"]
    vmem = _vmem_limit_bytes()
    weight_bytes = sum(int(W.size) * 2 + int(b.size) * 4 for W, b, _ in layers)
    max_width = max(ws.shape[1], max(int(W.shape[1]) for W, _, _ in layers))
    act_bytes = 4 * Bp * max_width * 4                   # rough: a few f32 copies
    fits = (weight_bytes + act_bytes) < (vmem * 6) // 10
    use_fused = head_mode == "fused" or (head_mode == "auto" and fits)

    if use_fused:
        y_hat_s = _head_fused(h, layers, vmem)[:B]
    else:
        for i, (W, b, relu) in enumerate(layers):
            last = i == len(layers) - 1
            h = _linear_streamed(
                h, W, b, apply_relu=relu,
                out_dtype=jnp.float32 if last else jnp.bfloat16,
                tk_target=tk_target, vmem=vmem)
        y_hat_s = h[:B]

    combined = y_hat_u + y_hat_s                         # trivial (B, C) add
    other = {"predicate": p_mean, "arg0": a0_mean, "arg1": a1_mean,
             "frameaxis": fx_mean}
    return y_hat_u, y_hat_s, combined, other


# ---------------------------------------------------------------------------
# Pure-JAX references (for the self-test)
# ---------------------------------------------------------------------------
def _ref_masked_mean(x):
    mask = (jnp.abs(x).sum(-1) != 0).astype(jnp.float32)
    num = (x * mask[..., None]).sum(1)
    den = jnp.maximum(mask.sum(1, keepdims=True), 1.0)
    return num / den


def _ref_forward(params, d_p, d_a0, d_a1, d_fx, vs, frameaxis_data,
                 concat_frameaxis=True, eps=1e-5):
    B, S, A, C = d_p.shape
    p = _ref_masked_mean(d_p.reshape(B, S * A, C))
    a0 = _ref_masked_mean(d_a0.reshape(B, S * A, C))
    a1 = _ref_masked_mean(d_a1.reshape(B, S * A, C))
    fx = _ref_masked_mean(d_fx)
    y_u = (p + a0 + a1 + fx) / 4.0

    h = _flatten_head_input(vs, frameaxis_data, concat_frameaxis)
    linears = params["linears"]
    bns = params["bns"]
    nl = len(bns)
    for l in range(nl):
        W, b = linears[l]
        h = h @ W + b
        gamma, beta, mean, var = bns[l]
        h = (h - mean) / jnp.sqrt(var + eps) * gamma + beta
        h = jnp.maximum(h, 0.0)
    W4, b4 = linears[nl]
    h = jnp.maximum(h @ W4 + b4, 0.0)
    W5, b5 = linears[nl + 1]
    y_s = h @ W5 + b5
    return y_u, y_s, y_u + y_s, {"predicate": p, "arg0": a0, "arg1": a1,
                                 "frameaxis": fx}


def _ref_head_bf16(prepared, ws):
    """Same dtype flow as the kernels (folded BN, bf16 weights, f32 acc)."""
    layers = prepared["layers"]
    n = len(layers)
    h = ws.astype(jnp.bfloat16)
    for i, (W, b, relu) in enumerate(layers):
        acc = jnp.dot(h, W, preferred_element_type=jnp.float32) + b
        if relu:
            acc = jnp.maximum(acc, 0.0)
        h = acc.astype(jnp.bfloat16) if i < n - 1 else acc
    return h


# ---------------------------------------------------------------------------
if __name__ == "__main__":
    B, S, A = 2, 16, 2
    embedding_dim = 16
    frameaxis_dim = 16
    # last dim of d_p/d_a0/d_a1/d_fx must equal num_classes so that
    # combined = y_hat_u + y_hat_s is well formed (as in the original model).
    num_classes = 16

    key = jax.random.PRNGKey(0)
    k = jax.random.split(key, 9)
    d_p = jax.random.normal(k[0], (B, S, A, num_classes), jnp.float32)
    d_a0 = jax.random.normal(k[1], (B, S, A, num_classes), jnp.float32)
    d_a1 = jax.random.normal(k[2], (B, S, A, num_classes), jnp.float32)
    d_fx = jax.random.normal(k[3], (B, S, num_classes), jnp.float32)
    vs = jax.random.normal(k[4], (B, S, embedding_dim), jnp.float32)
    frameaxis_data = jax.random.normal(k[5], (B, S, frameaxis_dim), jnp.float32)

    # zero out some instances so the mask / clamp(min=1) path is exercised
    d_p = d_p.at[:, 0, 0, :].set(0.0)
    d_a0 = d_a0.at[:, 1, 1, :].set(0.0)
    d_a1 = d_a1.at[0, 3, 0, :].set(0.0)
    d_fx = d_fx.at[:, 2, :].set(0.0)

    params = init_params(k[6], embedding_dim, num_classes, frameaxis_dim, S,
                         concat_frameaxis=True, num_layers=3)

    # non-trivial BatchNorm running stats so the BN fold is actually verified
    input_dim = params["input_dim"]
    rng = jax.random.split(k[7], 4 * len(params["bns"]))
    new_bns = []
    for i in range(len(params["bns"])):
        gamma = jax.random.uniform(rng[4 * i], (input_dim,), jnp.float32, 0.5, 1.5)
        beta = 0.1 * jax.random.normal(rng[4 * i + 1], (input_dim,), jnp.float32)
        mean = 0.1 * jax.random.normal(rng[4 * i + 2], (input_dim,), jnp.float32)
        var = jax.random.uniform(rng[4 * i + 3], (input_dim,), jnp.float32, 0.5, 1.5)
        new_bns.append((gamma, beta, mean, var))
    params["bns"] = new_bns

    prepared = prepare_params(params)        # BN fold + bf16 cast, exactly once

    # 1) fused-head path (auto dispatch picks it at these sizes)
    y_hat_u, y_hat_s, combined, other = slmuse_supervised_forward(
        prepared, d_p, d_a0, d_a1, d_fx, vs, frameaxis_data,
        concat_frameaxis=True, head_mode="auto")
    jax.block_until_ready((y_hat_u, y_hat_s, combined, other))

    # 2) streamed-head path (per-layer K-tiled weight stream, Buffered(3))
    _, y_hat_s_str, _, _ = slmuse_supervised_forward(
        prepared, d_p, d_a0, d_a1, d_fx, vs, frameaxis_data,
        concat_frameaxis=True, head_mode="streamed", tk_target=128)
    jax.block_until_ready(y_hat_s_str)

    assert y_hat_u.shape == (B, num_classes)
    assert y_hat_s.shape == (B, num_classes)
    assert combined.shape == (B, num_classes)

    # ---- references
    ref_u, ref_s, ref_comb, ref_other = _ref_forward(
        params, d_p, d_a0, d_a1, d_fx, vs, frameaxis_data)
    ref_s_bf16 = _ref_head_bf16(
        prepared, _flatten_head_input(vs, frameaxis_data, True))

    # masked means + y_hat_u are exact-division f32 -> tight
    np.testing.assert_allclose(np.asarray(other["predicate"]),
                               np.asarray(ref_other["predicate"]),
                               rtol=1e-5, atol=1e-5)
    np.testing.assert_allclose(np.asarray(other["frameaxis"]),
                               np.asarray(ref_other["frameaxis"]),
                               rtol=1e-5, atol=1e-5)
    np.testing.assert_allclose(np.asarray(y_hat_u), np.asarray(ref_u),
                               rtol=1e-5, atol=1e-5)
    # head: same dtype-flow reference (folded BN, bf16 weights, f32 acc)
    np.testing.assert_allclose(np.asarray(y_hat_s), np.asarray(ref_s_bf16),
                               rtol=5e-2, atol=5e-2)
    # head: full-f32 reference with explicit (unfolded) BatchNorm
    np.testing.assert_allclose(np.asarray(y_hat_s), np.asarray(ref_s),
                               rtol=1e-1, atol=1e-1)
    np.testing.assert_allclose(np.asarray(combined), np.asarray(ref_comb),
                               rtol=1e-1, atol=1e-1)
    # fused and streamed paths agree
    np.testing.assert_allclose(np.asarray(y_hat_s), np.asarray(y_hat_s_str),
                               rtol=5e-2, atol=5e-2)
    assert bool(jnp.all(jnp.isfinite(y_hat_s)))
    assert bool(jnp.all(jnp.isfinite(combined)))

    print("KERNEL_OK")
</pallas_src>

<mosaic_0001>
module attributes {stable_mosaic.version = 11 : i64} {
  func.func @_masked_means_kernel(%arg0: i32, %arg1: memref<2x32x16xf32, #tpu.memory_space<vmem>>, %arg2: memref<2x32x16xf32, #tpu.memory_space<vmem>>, %arg3: memref<2x32x16xf32, #tpu.memory_space<vmem>>, %arg4: memref<2x16x16xf32, #tpu.memory_space<vmem>>, %arg5: memref<2x16xf32, #tpu.memory_space<vmem>>, %arg6: memref<2x16xf32, #tpu.memory_space<vmem>>, %arg7: memref<2x16xf32, #tpu.memory_space<vmem>>, %arg8: memref<2x16xf32, #tpu.memory_space<vmem>>, %arg9: memref<2x16xf32, #tpu.memory_space<vmem>>) attributes {dimension_semantics = [#tpu.dimension_semantics<parallel>], iteration_bounds = array<i64: 1>, scalar_prefetch = 0 : i64, scratch_operands = 0 : i64, tpu.core_type = #tpu.core_type<tc>, window_params = [{transform_indices = @transform_0, window_bounds = array<i64: 2, 32, 16>}, {transform_indices = @transform_1, window_bounds = array<i64: 2, 32, 16>}, {transform_indices = @transform_2, window_bounds = array<i64: 2, 32, 16>}, {transform_indices = @transform_3, window_bounds = array<i64: 2, 16, 16>}, {transform_indices = @transform_4, window_bounds = array<i64: 2, 16>}, {transform_indices = @transform_5, window_bounds = array<i64: 2, 16>}, {transform_indices = @transform_6, window_bounds = array<i64: 2, 16>}, {transform_indices = @transform_7, window_bounds = array<i64: 2, 16>}, {transform_indices = @transform_8, window_bounds = array<i64: 2, 16>}]} {
    %c0 = arith.constant 0 : index
    %c0_0 = arith.constant 0 : index
    %c0_1 = arith.constant 0 : index
    %0 = vector.load %arg1[%c0, %c0_0, %c0_1] : memref<2x32x16xf32, #tpu.memory_space<vmem>>, vector<2x32x16xf32>
    %1 = math.absf %0 : vector<2x32x16xf32>
    %cst = arith.constant dense<0.000000e+00> : vector<2x32xf32>
    %2 = vector.multi_reduction <add>, %1, %cst [2] : vector<2x32x16xf32> to vector<2x32xf32>
    %cst_2 = arith.constant 0.000000e+00 : f32
    %3 = vector.broadcast %cst_2 : f32 to vector<2x32xf32>
    %4 = arith.cmpf one, %2, %3 : vector<2x32xf32>
    %5 = arith.extui %4 : vector<2x32xi1> to vector<2x32xi32>
    %6 = arith.sitofp %5 : vector<2x32xi32> to vector<2x32xf32>
    %7 = vector.shape_cast %6 : vector<2x32xf32> to vector<2x32x1xf32>
    %8 = vector.broadcast %7 : vector<2x32x1xf32> to vector<2x32x16xf32>
    %9 = arith.mulf %0, %8 : vector<2x32x16xf32>
    %cst_3 = arith.constant dense<0.000000e+00> : vector<2x16xf32>
    %10 = vector.multi_reduction <add>, %9, %cst_3 [1] : vector<2x32x16xf32> to vector<2x16xf32>
    %cst_4 = arith.constant dense<0.000000e+00> : vector<2xf32>
    %11 = vector.multi_reduction <add>, %6, %cst_4 [1] : vector<2x32xf32> to vector<2xf32>
    %12 = vector.shape_cast %11 : vector<2xf32> to vector<2x1xf32>
    %cst_5 = arith.constant 1.000000e+00 : f32
    %13 = vector.broadcast %cst_5 : f32 to vector<2x1xf32>
    %14 = arith.maximumf %12, %13 : vector<2x1xf32>
    %15 = vector.broadcast %14 : vector<2x1xf32> to vector<2x16xf32>
    %16 = arith.divf %10, %15 : vector<2x16xf32>
    %c0_6 = arith.constant 0 : index
    %c0_7 = arith.constant 0 : index
    %c0_8 = arith.constant 0 : index
    %17 = vector.load %arg2[%c0_6, %c0_7, %c0_8] : memref<2x32x16xf32, #tpu.memory_space<vmem>>, vector<2x32x16xf32>
    %18 = math.absf %17 : vector<2x32x16xf32>
    %cst_9 = arith.constant dense<0.000000e+00> : vector<2x32xf32>
    %19 = vector.multi_reduction <add>, %18, %cst_9 [2] : vector<2x32x16xf32> to vector<2x32xf32>
    %cst_10 = arith.constant 0.000000e+00 : f32
    %20 = vector.broadcast %cst_10 : f32 to vector<2x32xf32>
    %21 = arith.cmpf one, %19, %20 : vector<2x32xf32>
    %22 = arith.extui %21 : vector<2x32xi1> to vector<2x32xi32>
    %23 = arith.sitofp %22 : vector<2x32xi32> to vector<2x32xf32>
    %24 = vector.shape_cast %23 : vector<2x32xf32> to vector<2x32x1xf32>
    %25 = vector.broadcast %24 : vector<2x32x1xf32> to vector<2x32x16xf32>
    %26 = arith.mulf %17, %25 : vector<2x32x16xf32>
    %cst_11 = arith.constant dense<0.000000e+00> : vector<2x16xf32>
    %27 = vector.multi_reduction <add>, %26, %cst_11 [1] : vector<2x32x16xf32> to vector<2x16xf32>
    %cst_12 = arith.constant dense<0.000000e+00> : vector<2xf32>
    %28 = vector.multi_reduction <add>, %23, %cst_12 [1] : vector<2x32xf32> to vector<2xf32>
    %29 = vector.shape_cast %28 : vector<2xf32> to vector<2x1xf32>
    %cst_13 = arith.constant 1.000000e+00 : f32
    %30 = vector.broadcast %cst_13 : f32 to vector<2x1xf32>
    %31 = arith.maximumf %29, %30 : vector<2x1xf32>
    %32 = vector.broadcast %31 : vector<2x1xf32> to vector<2x16xf32>
    %33 = arith.divf %27, %32 : vector<2x16xf32>
    %c0_14 = arith.constant 0 : index
    %c0_15 = arith.constant 0 : index
    %c0_16 = arith.constant 0 : index
    %34 = vector.load %arg3[%c0_14, %c0_15, %c0_16] : memref<2x32x16xf32, #tpu.memory_space<vmem>>, vector<2x32x16xf32>
    %35 = math.absf %34 : vector<2x32x16xf32>
    %cst_17 = arith.constant dense<0.000000e+00> : vector<2x32xf32>
    %36 = vector.multi_reduction <add>, %35, %cst_17 [2] : vector<2x32x16xf32> to vector<2x32xf32>
    %cst_18 = arith.constant 0.000000e+00 : f32
    %37 = vector.broadcast %cst_18 : f32 to vector<2x32xf32>
    %38 = arith.cmpf one, %36, %37 : vector<2x32xf32>
    %39 = arith.extui %38 : vector<2x32xi1> to vector<2x32xi32>
    %40 = arith.sitofp %39 : vector<2x32xi32> to vector<2x32xf32>
    %41 = vector.shape_cast %40 : vector<2x32xf32> to vector<2x32x1xf32>
    %42 = vector.broadcast %41 : vector<2x32x1xf32> to vector<2x32x16xf32>
    %43 = arith.mulf %34, %42 : vector<2x32x16xf32>
    %cst_19 = arith.constant dense<0.000000e+00> : vector<2x16xf32>
    %44 = vector.multi_reduction <add>, %43, %cst_19 [1] : vector<2x32x16xf32> to vector<2x16xf32>
    %cst_20 = arith.constant dense<0.000000e+00> : vector<2xf32>
    %45 = vector.multi_reduction <add>, %40, %cst_20 [1] : vector<2x32xf32> to vector<2xf32>
    %46 = vector.shape_cast %45 : vector<2xf32> to vector<2x1xf32>
    %cst_21 = arith.constant 1.000000e+00 : f32
    %47 = vector.broadcast %cst_21 : f32 to vector<2x1xf32>
    %48 = arith.maximumf %46, %47 : vector<2x1xf32>
    %49 = vector.broadcast %48 : vector<2x1xf32> to vector<2x16xf32>
    %50 = arith.divf %44, %49 : vector<2x16xf32>
    %c0_22 = arith.constant 0 : index
    %c0_23 = arith.constant 0 : index
    %c0_24 = arith.constant 0 : index
    %51 = vector.load %arg4[%c0_22, %c0_23, %c0_24] : memref<2x16x16xf32, #tpu.memory_space<vmem>>, vector<2x16x16xf32>
    %52 = math.absf %51 : vector<2x16x16xf32>
    %cst_25 = arith.constant dense<0.000000e+00> : vector<2x16xf32>
    %53 = vector.multi_reduction <add>, %52, %cst_25 [2] : vector<2x16x16xf32> to vector<2x16xf32>
    %cst_26 = arith.constant 0.000000e+00 : f32
    %54 = vector.broadcast %cst_26 : f32 to vector<2x16xf32>
    %55 = arith.cmpf one, %53, %54 : vector<2x16xf32>
    %56 = arith.extui %55 : vector<2x16xi1> to vector<2x16xi32>
    %57 = arith.sitofp %56 : vector<2x16xi32> to vector<2x16xf32>
    %58 = vector.shape_cast %57 : vector<2x16xf32> to vector<2x16x1xf32>
    %59 = vector.broadcast %58 : vector<2x16x1xf32> to vector<2x16x16xf32>
    %60 = arith.mulf %51, %59 : vector<2x16x16xf32>
    %cst_27 = arith.constant dense<0.000000e+00> : vector<2x16xf32>
    %61 = vector.multi_reduction <add>, %60, %cst_27 [1] : vector<2x16x16xf32> to vector<2x16xf32>
    %cst_28 = arith.constant dense<0.000000e+00> : vector<2xf32>
    %62 = vector.multi_reduction <add>, %57, %cst_28 [1] : vector<2x16xf32> to vector<2xf32>
    %63 = vector.shape_cast %62 : vector<2xf32> to vector<2x1xf32>
    %cst_29 = arith.constant 1.000000e+00 : f32
    %64 = vector.broadcast %cst_29 : f32 to vector<2x1xf32>
    %65 = arith.maximumf %63, %64 : vector<2x1xf32>
    %66 = vector.broadcast %65 : vector<2x1xf32> to vector<2x16xf32>
    %67 = arith.divf %61, %66 : vector<2x16xf32>
    %c0_30 = arith.constant 0 : index
    %c0_31 = arith.constant 0 : index
    %68 = vector.load %arg5[%c0_30, %c0_31] : memref<2x16xf32, #tpu.memory_space<vmem>>, vector<2x16xf32>
    tpu.vector_store %arg5[%c0_30, %c0_31], %16 {strides = array<i32>} : memref<2x16xf32, #tpu.memory_space<vmem>>, vector<2x16xf32>,
    %c0_32 = arith.constant 0 : index
    %c0_33 = arith.constant 0 : index
    %69 = vector.load %arg6[%c0_32, %c0_33] : memref<2x16xf32, #tpu.memory_space<vmem>>, vector<2x16xf32>
    tpu.vector_store %arg6[%c0_32, %c0_33], %33 {strides = array<i32>} : memref<2x16xf32, #tpu.memory_space<vmem>>, vector<2x16xf32>,
    %c0_34 = arith.constant 0 : index
    %c0_35 = arith.constant 0 : index
    %70 = vector.load %arg7[%c0_34, %c0_35] : memref<2x16xf32, #tpu.memory_space<vmem>>, vector<2x16xf32>
    tpu.vector_store %arg7[%c0_34, %c0_35], %50 {strides = array<i32>} : memref<2x16xf32, #tpu.memory_space<vmem>>, vector<2x16xf32>,
    %c0_36 = arith.constant 0 : index
    %c0_37 = arith.constant 0 : index
    %71 = vector.load %arg8[%c0_36, %c0_37] : memref<2x16xf32, #tpu.memory_space<vmem>>, vector<2x16xf32>
    tpu.vector_store %arg8[%c0_36, %c0_37], %67 {strides = array<i32>} : memref<2x16xf32, #tpu.memory_space<vmem>>, vector<2x16xf32>,
    %72 = arith.addf %16, %33 : vector<2x16xf32>
    %73 = arith.addf %72, %50 : vector<2x16xf32>
    %74 = arith.addf %73, %67 : vector<2x16xf32>
    %cst_38 = arith.constant 2.500000e-01 : f32
    %75 = vector.broadcast %cst_38 : f32 to vector<2x16xf32>
    %76 = arith.mulf %74, %75 : vector<2x16xf32>
    %c0_39 = arith.constant 0 : index
    %c0_40 = arith.constant 0 : index
    %77 = vector.load %arg9[%c0_39, %c0_40] : memref<2x16xf32, #tpu.memory_space<vmem>>, vector<2x16xf32>
    tpu.vector_store %arg9[%c0_39, %c0_40], %76 {strides = array<i32>} : memref<2x16xf32, #tpu.memory_space<vmem>>, vector<2x16xf32>,
    return
  }
  func.func @transform_0(%arg0: i32) -> (i32, i32, i32) {
    %c0_i32 = arith.constant 0 : i32
    %c0_i32_0 = arith.constant 0 : i32
    %c0_i32_1 = arith.constant 0 : i32
    return %arg0, %c0_i32, %c0_i32_0 : i32, i32, i32
  }
  func.func @transform_1(%arg0: i32) -> (i32, i32, i32) {
    %c0_i32 = arith.constant 0 : i32
    %c0_i32_0 = arith.constant 0 : i32
    %c0_i32_1 = arith.constant 0 : i32
    return %arg0, %c0_i32, %c0_i32_0 : i32, i32, i32
  }
  func.func @transform_2(%arg0: i32) -> (i32, i32, i32) {
    %c0_i32 = arith.constant 0 : i32
    %c0_i32_0 = arith.constant 0 : i32
    %c0_i32_1 = arith.constant 0 : i32
    return %arg0, %c0_i32, %c0_i32_0 : i32, i32, i32
  }
  func.func @transform_3(%arg0: i32) -> (i32, i32, i32) {
    %c0_i32 = arith.constant 0 : i32
    %c0_i32_0 = arith.constant 0 : i32
    %c0_i32_1 = arith.constant 0 : i32
    return %arg0, %c0_i32, %c0_i32_0 : i32, i32, i32
  }
  func.func @transform_4(%arg0: i32) -> (i32, i32) {
    %c0_i32 = arith.constant 0 : i32
    %c0_i32_0 = arith.constant 0 : i32
    return %arg0, %c0_i32 : i32, i32
  }
  func.func @transform_5(%arg0: i32) -> (i32, i32) {
    %c0_i32 = arith.constant 0 : i32
    %c0_i32_0 = arith.constant 0 : i32
    return %arg0, %c0_i32 : i32, i32
  }
  func.func @transform_6(%arg0: i32) -> (i32, i32) {
    %c0_i32 = arith.constant 0 : i32
    %c0_i32_0 = arith.constant 0 : i32
    return %arg0, %c0_i32 : i32, i32
  }
  func.func @transform_7(%arg0: i32) -> (i32, i32) {
    %c0_i32 = arith.constant 0 : i32
    %c0_i32_0 = arith.constant 0 : i32
    return %arg0, %c0_i32 : i32, i32
  }
  func.func @transform_8(%arg0: i32) -> (i32, i32) {
    %c0_i32 = arith.constant 0 : i32
    %c0_i32_0 = arith.constant 0 : i32
    return %arg0, %c0_i32 : i32, i32
  }
}

</mosaic_0001>

<llo_original>
// kernel: tpu_custom_call.1
$region0: #{tpu_custom_call.1}
  #allocation0 [shape = 'u32[]', space=smem, size = 0x4, offset = 0x4, fixed_abs, tag = 'smem constant byte address 0x4 - core index']
  #allocation1 [shape = 'u32[72,128]{1,0:T(1,128)}', space=vmem, size = 0x9000, scoped, tag = 'internal scratch']
  %s0 = inlined_call_operand.vmem [shape: f32[2,32,16], index: 0, kind: input, shape index: {}]
  %s1 = inlined_call_operand.vmem [shape: f32[2,32,16], index: 1, kind: input, shape index: {}]
  %s2 = inlined_call_operand.vmem [shape: f32[2,32,16], index: 2, kind: input, shape index: {}]
  %s3 = inlined_call_operand.vmem [shape: f32[2,16,16], index: 3, kind: input, shape index: {}]
  %s4 = inlined_call_operand.hbm [shape: f32[2,16], index: 4, kind: output, shape index: {0}]
  %s5 = inlined_call_operand.hbm [shape: f32[2,16], index: 5, kind: output, shape index: {1}]
  %s6 = inlined_call_operand.hbm [shape: f32[2,16], index: 6, kind: output, shape index: {2}]
  %s7 = inlined_call_operand.hbm [shape: f32[2,16], index: 7, kind: output, shape index: {3}]
  %s8 = inlined_call_operand.hbm [shape: f32[2,16], index: 8, kind: output, shape index: {4}]
  %9 = xla_tuple %s4, %s5, %s6, %s7, %s8
  %s10 = sld [smem:[#allocation0]]
  $region58: #{tpu_custom_call.1} parent=0
    _
  %s12 = ssub.s32 1, %s10
  %s13 = scalar_select 0, %s12, %s10
  $region1: #{tpu_custom_call.1} parent=0
    #allocation2 [shape = 'u8[1024]{0}', space=vmem, size = 0x400, scoped, tag = 'output window, operand 0, single buffered']
    #allocation3 [shape = 's32[1]{0}', space=sflag, size = 0x4, scoped, tag = 'scoped memory for tpu_custom_call.1']
    #allocation4 [shape = 'u8[1024]{0}', space=vmem, size = 0x400, scoped, tag = 'output window, operand 1, single buffered']
    #allocation5 [shape = 's32[1]{0}', space=sflag, size = 0x4, scoped, tag = 'scoped memory for tpu_custom_call.1']
    #allocation6 [shape = 'u8[1024]{0}', space=vmem, size = 0x400, scoped, tag = 'output window, operand 2, single buffered']
    #allocation7 [shape = 'u8[1024]{0}', space=vmem, size = 0x400, scoped, tag = 'output window, operand 3, single buffered']
    #allocation8 [shape = 's32[1]{0}', space=sflag, size = 0x4, scoped, tag = 'scoped memory for tpu_custom_call.1']
    #allocation9 [shape = 'u8[1024]{0}', space=vmem, size = 0x400, scoped, tag = 'output window, operand 4, single buffered']
    %14 = vsyncpa [#allocation3], 0
    %15 = vsyncpa [#allocation5], 0
    %16 = vsyncpa [#allocation8], 0
    // Predicated region
    $region2: #{tpu_custom_call.1} parent=1 // pred_check
      _
    $region3: #{tpu_custom_call.1} parent=1 // pred_check_branch
      %18 = sbr.rel (0) target = $region5
    $region4: #{tpu_custom_call.1} parent=1 // pred_region
      _
    $region5: #{tpu_custom_call.1} parent=1 // pred_fallthru
      _
    // Predicated region
    $region6: #{tpu_custom_call.1} parent=1 // pred_check
      _
    $region7: #{tpu_custom_call.1} parent=1 // pred_check_branch
      %20 = sbr.rel (0) target = $region9
    $region8: #{tpu_custom_call.1} parent=1 // pred_region
      _
    $region9: #{tpu_custom_call.1} parent=1 // pred_fallthru
      _
    // Predicated region
    $region10: #{tpu_custom_call.1} parent=1 // pred_check
      _
    $region11: #{tpu_custom_call.1} parent=1 // pred_check_branch
      %22 = sbr.rel (0) target = $region13
    $region12: #{tpu_custom_call.1} parent=1 // pred_region
      _
    $region13: #{tpu_custom_call.1} parent=1 // pred_fallthru
      _
    // Predicated region
    $region14: #{tpu_custom_call.1} parent=1 // pred_check
      _
    $region15: #{tpu_custom_call.1} parent=1 // pred_check_branch
      %24 = sbr.rel (0) target = $region17
    $region16: #{tpu_custom_call.1} parent=1 // pred_region
      _
    $region17: #{tpu_custom_call.1} parent=1 // pred_fallthru
      _
    %v25 = vld [vmem:[%s0] sm:$0xff]
    %v26 = vld [vmem:[%s0 + $0x8] sm:$0xff]
    %v27 = vld [vmem:[%s0 + $0x10] sm:$0xff]
    %v28 = vld [vmem:[%s0 + $0x18] sm:$0xff]
    %v29 = vld [vmem:[%s0 + $0x20] sm:$0xff]
    %v30 = vld [vmem:[%s0 + $0x28] sm:$0xff]
    %v31 = vld [vmem:[%s0 + $0x30] sm:$0xff]
    %v32 = vld [vmem:[%s0 + $0x38] sm:$0xff]
    %v33 = vand.u32 2147483647, %v25
    %v34 = vand.u32 2147483647, %v26
    %v35 = vand.u32 2147483647, %v27
    %v36 = vand.u32 2147483647, %v28
    %v37 = vand.u32 2147483647, %v29
    %v38 = vand.u32 2147483647, %v30
    %v39 = vand.u32 2147483647, %v31
    %v40 = vand.u32 2147483647, %v32
    %vm41 = vcmask 130048
    %v42 = vsel %vm41, %v33, 0.0
    %43 = vadd.xlane.f32.xlu0 %v42
    %v44 = vpop.xlane.xlu0 %43
    %v45 = vsel %vm41, %v34, 0.0
    %46 = vadd.xlane.f32.xlu0 %v45
    %v47 = vpop.xlane.xlu0 %46
    %v48 = vsel %vm41, %v35, 0.0
    %49 = vadd.xlane.f32.xlu0 %v48
    %v50 = vpop.xlane.xlu0 %49
    %v51 = vsel %vm41, %v36, 0.0
    %52 = vadd.xlane.f32.xlu0 %v51
    %v53 = vpop.xlane.xlu0 %52
    %v54 = vsel %vm41, %v37, 0.0
    %55 = vadd.xlane.f32.xlu0 %v54
    %v56 = vpop.xlane.xlu0 %55
    %v57 = vsel %vm41, %v38, 0.0
    %58 = vadd.xlane.f32.xlu0 %v57
    %v59 = vpop.xlane.xlu0 %58
    %v60 = vsel %vm41, %v39, 0.0
    %61 = vadd.xlane.f32.xlu0 %v60
    %v62 = vpop.xlane.xlu0 %61
    %v63 = vsel %vm41, %v40, 0.0
    %64 = vadd.xlane.f32.xlu0 %v63
    %v65 = vpop.xlane.xlu0 %64
    %vm66 = vcmp.ne.f32.partialorder %v44, 0.0
    %vm67 = vcmp.ne.f32.partialorder %v47, 0.0
    %vm68 = vcmp.ne.f32.partialorder %v50, 0.0
    %vm69 = vcmp.ne.f32.partialorder %v53, 0.0
    %vm70 = vcmp.ne.f32.partialorder %v56, 0.0
    %vm71 = vcmp.ne.f32.partialorder %v59, 0.0
    %vm72 = vcmp.ne.f32.partialorder %v62, 0.0
    %vm73 = vcmp.ne.f32.partialorder %v65, 0.0
    %v74 = vsel %vm66, 1, 0
    %v75 = vsel %vm67, 1, 0
    %v76 = vsel %vm68, 1, 0
    %v77 = vsel %vm69, 1, 0
    %v78 = vsel %vm70, 1, 0
    %v79 = vsel %vm71, 1, 0
    %v80 = vsel %vm72, 1, 0
    %v81 = vsel %vm73, 1, 0
    %v82 = vcvt.s32.f32 %v74
    %v83 = vcvt.s32.f32 %v75
    %v84 = vcvt.s32.f32 %v76
    %v85 = vcvt.s32.f32 %v77
    %v86 = vcvt.s32.f32 %v78
    %v87 = vcvt.s32.f32 %v79
    %v88 = vcvt.s32.f32 %v80
    %v89 = vcvt.s32.f32 %v81
    %v90 = vmul.f32 %v25, %v82
    %v91 = vmul.f32 %v26, %v83
    %v92 = vmul.f32 %v27, %v84
    %v93 = vmul.f32 %v28, %v85
    %v94 = vmul.f32 %v29, %v86
    %v95 = vmul.f32 %v30, %v87
    %v96 = vmul.f32 %v31, %v88
    %v97 = vmul.f32 %v32, %v89
    %v98 = vsel %vm41, %v90, 0.0
    %v99 = vsel %vm41, %v91, 0.0
    %v100 = vadd.f32 %v98, %v99
    %v101 = vsel %vm41, %v92, 0.0
    %v102 = vadd.f32 %v100, %v101
    %v103 = vsel %vm41, %v93, 0.0
    %v104 = vadd.f32 %v102, %v103
    %v105 = vrot.slane %v104, 4
    %v106 = vadd.f32 %v104, %v105
    %v107 = vrot.slane %v106, 2
    %v108 = vadd.f32 %v106, %v107
    %v109 = vrot.slane %v108, 1
    %v110 = vadd.f32 %v108, %v109
    %v111 = vsel %vm41, %v94, 0.0
    %v112 = vsel %vm41, %v95, 0.0
    %v113 = vadd.f32 %v111, %v112
    %v114 = vsel %vm41, %v96, 0.0
    %v115 = vadd.f32 %v113, %v114
    %v116 = vsel %vm41, %v97, 0.0
    %v117 = vadd.f32 %v115, %v116
    %v118 = vrot.slane %v117, 4
    %v119 = vadd.f32 %v117, %v118
    %v120 = vrot.slane %v119, 2
    %v121 = vadd.f32 %v119, %v120
    %v122 = vrot.slane %v121, 1
    %v123 = vadd.f32 %v121, %v122
    %v132 = vlaneseq
    %v133 = vand.u32 %v132, 127
    %v134 = vperm.slane %v82, %v133
    %v135 = vadd.s32 %v133, 4294967288
    %v136 = vperm.slane %v83, %v135
    %vm137 = vcmask 130112
    %v138 = vsel %vm137, %v136, %v134
    %v139 = vadd.s32 %v133, 4294967280
    %v140 = vperm.slane %v84, %v139
    %vm141 = vcmask 195712
    %v142 = vsel %vm141, %v140, %v138
    %v143 = vadd.s32 %v133, 4294967272
    %v144 = vperm.slane %v85, %v143
    %vm145 = vcmask 261312
    %v146 = vsel %vm145, %v144, %v142
    %v147 = vperm.slane %v86, %v133
    %v148 = vperm.slane %v87, %v135
    %v149 = vsel %vm137, %v148, %v147
    %v150 = vperm.slane %v88, %v139
    %v151 = vsel %vm141, %v150, %v149
    %v152 = vperm.slane %v89, %v143
    %v153 = vsel %vm145, %v152, %v151
    %vm154 = vcmask 1041409
    %v155 = vsel %vm154, %v153, %v146
    %vm157 = vcmask 254976
    %v158 = vsel %vm157, %v155, 0.0
    %159 = vadd.xlane.f32.xlu0 %v158
    %v160 = vpop.xlane.xlu0 %159
    %v161 = vmax.f32 %v160, 1.0
    %v163 = vrot.slane %v161, 1
    %v166 = vrcp.pop %v161
    %v167 = vmul.f32 %v161, %v166
    %v168 = vsub.f32 1.0, %v167
    %v169 = vmul.f32 %v166, %v168
    %v170 = vadd.f32 %v166, %v169
    %vm171 = vweird.f32 %v161
    %vm172 = vweird.f32 %v166
    %vm173 = vmor %vm171, %vm172
    %v174 = vsel %vm173, %v166, %v170
    %v175 = vand.u32 2147483647, %v161
    %vm176 = vcmp.eq.f32.partialorder %v175, 8.507059e+37
    %v177 = vand.u32 %v161, 2147483648
    %v178 = vor.u32 1.1754944e-38, %v177
    %v179 = vsel %vm176, %v178, %v174
    %v180 = vmul.f32 %v110, %v179
    %v181 = vrcp.pop %v163
    %v182 = vmul.f32 %v163, %v181
    %v183 = vsub.f32 1.0, %v182
    %v184 = vmul.f32 %v181, %v183
    %v185 = vadd.f32 %v181, %v184
    %vm186 = vweird.f32 %v163
    %vm187 = vweird.f32 %v181
    %vm188 = vmor %vm186, %vm187
    %v189 = vsel %vm188, %v181, %v185
    %v190 = vand.u32 2147483647, %v163
    %vm191 = vcmp.eq.f32.partialorder %v190, 8.507059e+37
    %v192 = vand.u32 %v163, 2147483648
    %v193 = vor.u32 1.1754944e-38, %v192
    %v194 = vsel %vm191, %v193, %v189
    %v195 = vmul.f32 %v123, %v194
    %v196 = vld [vmem:[%s1] sm:$0xff]
    %v197 = vld [vmem:[%s1 + $0x8] sm:$0xff]
    %v198 = vld [vmem:[%s1 + $0x10] sm:$0xff]
    %v199 = vld [vmem:[%s1 + $0x18] sm:$0xff]
    %v200 = vld [vmem:[%s1 + $0x20] sm:$0xff]
    %v201 = vld [vmem:[%s1 + $0x28] sm:$0xff]
    %v202 = vld [vmem:[%s1 + $0x30] sm:$0xff]
    %v203 = vld [vmem:[%s1 + $0x38] sm:$0xff]
    %v204 = vand.u32 2147483647, %v196
    %v205 = vand.u32 2147483647, %v197
    %v206 = vand.u32 2147483647, %v198
    %v207 = vand.u32 2147483647, %v199
    %v208 = vand.u32 2147483647, %v200
    %v209 = vand.u32 2147483647, %v201
    %v210 = vand.u32 2147483647, %v202
    %v211 = vand.u32 2147483647, %v203
    %v212 = vsel %vm41, %v204, 0.0
    %213 = vadd.xlane.f32.xlu0 %v212
    %v214 = vpop.xlane.xlu0 %213
    %v215 = vsel %vm41, %v205, 0.0
    %216 = vadd.xlane.f32.xlu0 %v215
    %v217 = vpop.xlane.xlu0 %216
    %v218 = vsel %vm41, %v206, 0.0
    %219 = vadd.xlane.f32.xlu0 %v218
    %v220 = vpop.xlane.xlu0 %219
    %v221 = vsel %vm41, %v207, 0.0
    %222 = vadd.xlane.f32.xlu0 %v221
    %v223 = vpop.xlane.xlu0 %222
    %v224 = vsel %vm41, %v208, 0.0
    %225 = vadd.xlane.f32.xlu0 %v224
    %v226 = vpop.xlane.xlu0 %225
    %v227 = vsel %vm41, %v209, 0.0
    %228 = vadd.xlane.f32.xlu0 %v227
    %v229 = vpop.xlane.xlu0 %228
    %v230 = vsel %vm41, %v210, 0.0
    %231 = vadd.xlane.f32.xlu0 %v230
    %v232 = vpop.xlane.xlu0 %231
    %v233 = vsel %vm41, %v211, 0.0
    %234 = vadd.xlane.f32.xlu0 %v233
    %v235 = vpop.xlane.xlu0 %234
    %vm236 = vcmp.ne.f32.partialorder %v214, 0.0
    %vm237 = vcmp.ne.f32.partialorder %v217, 0.0
    %vm238 = vcmp.ne.f32.partialorder %v220, 0.0
    %vm239 = vcmp.ne.f32.partialorder %v223, 0.0
    %vm240 = vcmp.ne.f32.partialorder %v226, 0.0
    %vm241 = vcmp.ne.f32.partialorder %v229, 0.0
    %vm242 = vcmp.ne.f32.partialorder %v232, 0.0
    %vm243 = vcmp.ne.f32.partialorder %v235, 0.0
    %v244 = vsel %vm236, 1, 0
    %v245 = vsel %vm237, 1, 0
    %v246 = vsel %vm238, 1, 0
    %v247 = vsel %vm239, 1, 0
    %v248 = vsel %vm240, 1, 0
    %v249 = vsel %vm241, 1, 0
    %v250 = vsel %vm242, 1, 0
    %v251 = vsel %vm243, 1, 0
    %v252 = vcvt.s32.f32 %v244
    %v253 = vcvt.s32.f32 %v245
    %v254 = vcvt.s32.f32 %v246
    %v255 = vcvt.s32.f32 %v247
    %v256 = vcvt.s32.f32 %v248
    %v257 = vcvt.s32.f32 %v249
    %v258 = vcvt.s32.f32 %v250
    %v259 = vcvt.s32.f32 %v251
    %v260 = vmul.f32 %v196, %v252
    %v261 = vmul.f32 %v197, %v253
    %v262 = vmul.f32 %v198, %v254
    %v263 = vmul.f32 %v199, %v255
    %v264 = vmul.f32 %v200, %v256
    %v265 = vmul.f32 %v201, %v257
    %v266 = vmul.f32 %v202, %v258
    %v267 = vmul.f32 %v203, %v259
    %v268 = vsel %vm41, %v260, 0.0
    %v269 = vsel %vm41, %v261, 0.0
    %v270 = vadd.f32 %v268, %v269
    %v271 = vsel %vm41, %v262, 0.0
    %v272 = vadd.f32 %v270, %v271
    %v273 = vsel %vm41, %v263, 0.0
    %v274 = vadd.f32 %v272, %v273
    %v275 = vrot.slane %v274, 4
    %v276 = vadd.f32 %v274, %v275
    %v277 = vrot.slane %v276, 2
    %v278 = vadd.f32 %v276, %v277
    %v279 = vrot.slane %v278, 1
    %v280 = vadd.f32 %v278, %v279
    %v281 = vsel %vm41, %v264, 0.0
    %v282 = vsel %vm41, %v265, 0.0
    %v283 = vadd.f32 %v281, %v282
    %v284 = vsel %vm41, %v266, 0.0
    %v285 = vadd.f32 %v283, %v284
    %v286 = vsel %vm41, %v267, 0.0
    %v287 = vadd.f32 %v285, %v286
    %v288 = vrot.slane %v287, 4
    %v289 = vadd.f32 %v287, %v288
    %v290 = vrot.slane %v289, 2
    %v291 = vadd.f32 %v289, %v290
    %v292 = vrot.slane %v291, 1
    %v293 = vadd.f32 %v291, %v292
    %v302 = vperm.slane %v252, %v133
    %v303 = vperm.slane %v253, %v135
    %v304 = vsel %vm137, %v303, %v302
    %v305 = vperm.slane %v254, %v139
    %v306 = vsel %vm141, %v305, %v304
    %v307 = vperm.slane %v255, %v143
    %v308 = vsel %vm145, %v307, %v306
    %v309 = vperm.slane %v256, %v133
    %v310 = vperm.slane %v257, %v135
    %v311 = vsel %vm137, %v310, %v309
    %v312 = vperm.slane %v258, %v139
    %v313 = vsel %vm141, %v312, %v311
    %v314 = vperm.slane %v259, %v143
    %v315 = vsel %vm145, %v314, %v313
    %v316 = vsel %vm154, %v315, %v308
    %v318 = vsel %vm157, %v316, 0.0
    %319 = vadd.xlane.f32.xlu0 %v318
    %v320 = vpop.xlane.xlu0 %319
    %v321 = vmax.f32 %v320, 1.0
    %v323 = vrot.slane %v321, 1
    %v326 = vrcp.pop %v321
    %v327 = vmul.f32 %v321, %v326
    %v328 = vsub.f32 1.0, %v327
    %v329 = vmul.f32 %v326, %v328
    %v330 = vadd.f32 %v326, %v329
    %vm331 = vweird.f32 %v321
    %vm332 = vweird.f32 %v326
    %vm333 = vmor %vm331, %vm332
    %v334 = vsel %vm333, %v326, %v330
    %v335 = vand.u32 2147483647, %v321
    %vm336 = vcmp.eq.f32.partialorder %v335, 8.507059e+37
    %v337 = vand.u32 %v321, 2147483648
    %v338 = vor.u32 1.1754944e-38, %v337
    %v339 = vsel %vm336, %v338, %v334
    %v340 = vmul.f32 %v280, %v339
    %v341 = vrcp.pop %v323
    %v342 = vmul.f32 %v323, %v341
    %v343 = vsub.f32 1.0, %v342
    %v344 = vmul.f32 %v341, %v343
    %v345 = vadd.f32 %v341, %v344
    %vm346 = vweird.f32 %v323
    %vm347 = vweird.f32 %v341
    %vm348 = vmor %vm346, %vm347
    %v349 = vsel %vm348, %v341, %v345
    %v350 = vand.u32 2147483647, %v323
    %vm351 = vcmp.eq.f32.partialorder %v350, 8.507059e+37
    %v352 = vand.u32 %v323, 2147483648
    %v353 = vor.u32 1.1754944e-38, %v352
    %v354 = vsel %vm351, %v353, %v349
    %v355 = vmul.f32 %v293, %v354
    %v356 = vld [vmem:[%s2] sm:$0xff]
    %v357 = vld [vmem:[%s2 + $0x8] sm:$0xff]
    %v358 = vld [vmem:[%s2 + $0x10] sm:$0xff]
    %v359 = vld [vmem:[%s2 + $0x18] sm:$0xff]
    %v360 = vld [vmem:[%s2 + $0x20] sm:$0xff]
    %v361 = vld [vmem:[%s2 + $0x28] sm:$0xff]
    %v362 = vld [vmem:[%s2 + $0x30] sm:$0xff]
    %v363 = vld [vmem:[%s2 + $0x38] sm:$0xff]
    %v364 = vand.u32 2147483647, %v356
    %v365 = vand.u32 2147483647, %v357
    %v366 = vand.u32 2147483647, %v358
    %v367 = vand.u32 2147483647, %v359
    %v368 = vand.u32 2147483647, %v360
    %v369 = vand.u32 2147483647, %v361
    %v370 = vand.u32 2147483647, %v362
    %v371 = vand.u32 2147483647, %v363
    %v372 = vsel %vm41, %v364, 0.0
    %373 = vadd.xlane.f32.xlu0 %v372
    %v374 = vpop.xlane.xlu0 %373
    %v375 = vsel %vm41, %v365, 0.0
    %376 = vadd.xlane.f32.xlu0 %v375
    %v377 = vpop.xlane.xlu0 %376
    %v378 = vsel %vm41, %v366, 0.0
    %379 = vadd.xlane.f32.xlu0 %v378
    %v380 = vpop.xlane.xlu0 %379
    %v381 = vsel %vm41, %v367, 0.0
    %382 = vadd.xlane.f32.xlu0 %v381
    %v383 = vpop.xlane.xlu0 %382
    %v384 = vsel %vm41, %v368, 0.0
    %385 = vadd.xlane.f32.xlu0 %v384
    %v386 = vpop.xlane.xlu0 %385
    %v387 = vsel %vm41, %v369, 0.0
    %388 = vadd.xlane.f32.xlu0 %v387
    %v389 = vpop.xlane.xlu0 %388
    %v390 = vsel %vm41, %v370, 0.0
    %391 = vadd.xlane.f32.xlu0 %v390
    %v392 = vpop.xlane.xlu0 %391
    %v393 = vsel %vm41, %v371, 0.0
    %394 = vadd.xlane.f32.xlu0 %v393
    %v395 = vpop.xlane.xlu0 %394
    %vm396 = vcmp.ne.f32.partialorder %v374, 0.0
    %vm397 = vcmp.ne.f32.partialorder %v377, 0.0
    %vm398 = vcmp.ne.f32.partialorder %v380, 0.0
    %vm399 = vcmp.ne.f32.partialorder %v383, 0.0
    %vm400 = vcmp.ne.f32.partialorder %v386, 0.0
    %vm401 = vcmp.ne.f32.partialorder %v389, 0.0
    %vm402 = vcmp.ne.f32.partialorder %v392, 0.0
    %vm403 = vcmp.ne.f32.partialorder %v395, 0.0
    %v404 = vsel %vm396, 1, 0
    %v405 = vsel %vm397, 1, 0
    %v406 = vsel %vm398, 1, 0
    %v407 = vsel %vm399, 1, 0
    %v408 = vsel %vm400, 1, 0
    %v409 = vsel %vm401, 1, 0
    %v410 = vsel %vm402, 1, 0
    %v411 = vsel %vm403, 1, 0
    %v412 = vcvt.s32.f32 %v404
    %v413 = vcvt.s32.f32 %v405
    %v414 = vcvt.s32.f32 %v406
    %v415 = vcvt.s32.f32 %v407
    %v416 = vcvt.s32.f32 %v408
    %v417 = vcvt.s32.f32 %v409
    %v418 = vcvt.s32.f32 %v410
    %v419 = vcvt.s32.f32 %v411
    %v420 = vmul.f32 %v356, %v412
    %v421 = vmul.f32 %v357, %v413
    %v422 = vmul.f32 %v358, %v414
    %v423 = vmul.f32 %v359, %v415
    %v424 = vmul.f32 %v360, %v416
    %v425 = vmul.f32 %v361, %v417
    %v426 = vmul.f32 %v362, %v418
    %v427 = vmul.f32 %v363, %v419
    %v428 = vsel %vm41, %v420, 0.0
    %v429 = vsel %vm41, %v421, 0.0
    %v430 = vadd.f32 %v428, %v429
    %v431 = vsel %vm41, %v422, 0.0
    %v432 = vadd.f32 %v430, %v431
    %v433 = vsel %vm41, %v423, 0.0
    %v434 = vadd.f32 %v432, %v433
    %v435 = vrot.slane %v434, 4
    %v436 = vadd.f32 %v434, %v435
    %v437 = vrot.slane %v436, 2
    %v438 = vadd.f32 %v436, %v437
    %v439 = vrot.slane %v438, 1
    %v440 = vadd.f32 %v438, %v439
    %v441 = vsel %vm41, %v424, 0.0
    %v442 = vsel %vm41, %v425, 0.0
    %v443 = vadd.f32 %v441, %v442
    %v444 = vsel %vm41, %v426, 0.0
    %v445 = vadd.f32 %v443, %v444
    %v446 = vsel %vm41, %v427, 0.0
    %v447 = vadd.f32 %v445, %v446
    %v448 = vrot.slane %v447, 4
    %v449 = vadd.f32 %v447, %v448
    %v450 = vrot.slane %v449, 2
    %v451 = vadd.f32 %v449, %v450
    %v452 = vrot.slane %v451, 1
    %v453 = vadd.f32 %v451, %v452
    %v462 = vperm.slane %v412, %v133
    %v463 = vperm.slane %v413, %v135
    %v464 = vsel %vm137, %v463, %v462
    %v465 = vperm.slane %v414, %v139
    %v466 = vsel %vm141, %v465, %v464
    %v467 = vperm.slane %v415, %v143
    %v468 = vsel %vm145, %v467, %v466
    %v469 = vperm.slane %v416, %v133
    %v470 = vperm.slane %v417, %v135
    %v471 = vsel %vm137, %v470, %v469
    %v472 = vperm.slane %v418, %v139
    %v473 = vsel %vm141, %v472, %v471
    %v474 = vperm.slane %v419, %v143
    %v475 = vsel %vm145, %v474, %v473
    %v476 = vsel %vm154, %v475, %v468
    %v478 = vsel %vm157, %v476, 0.0
    %479 = vadd.xlane.f32.xlu0 %v478
    %v480 = vpop.xlane.xlu0 %479
    %v481 = vmax.f32 %v480, 1.0
    %v483 = vrot.slane %v481, 1
    %v486 = vrcp.pop %v481
    %v487 = vmul.f32 %v481, %v486
    %v488 = vsub.f32 1.0, %v487
    %v489 = vmul.f32 %v486, %v488
    %v490 = vadd.f32 %v486, %v489
    %vm491 = vweird.f32 %v481
    %vm492 = vweird.f32 %v486
    %vm493 = vmor %vm491, %vm492
    %v494 = vsel %vm493, %v486, %v490
    %v495 = vand.u32 2147483647, %v481
    %vm496 = vcmp.eq.f32.partialorder %v495, 8.507059e+37
    %v497 = vand.u32 %v481, 2147483648
    %v498 = vor.u32 1.1754944e-38, %v497
    %v499 = vsel %vm496, %v498, %v494
    %v500 = vmul.f32 %v440, %v499
    %v501 = vrcp.pop %v483
    %v502 = vmul.f32 %v483, %v501
    %v503 = vsub.f32 1.0, %v502
    %v504 = vmul.f32 %v501, %v503
    %v505 = vadd.f32 %v501, %v504
    %vm506 = vweird.f32 %v483
    %vm507 = vweird.f32 %v501
    %vm508 = vmor %vm506, %vm507
    %v509 = vsel %vm508, %v501, %v505
    %v510 = vand.u32 2147483647, %v483
    %vm511 = vcmp.eq.f32.partialorder %v510, 8.507059e+37
    %v512 = vand.u32 %v483, 2147483648
    %v513 = vor.u32 1.1754944e-38, %v512
    %v514 = vsel %vm511, %v513, %v509
    %v515 = vmul.f32 %v453, %v514
    %v516 = vld [vmem:[%s3] sm:$0xff]
    %v517 = vld [vmem:[%s3 + $0x8] sm:$0xff]
    %v518 = vld [vmem:[%s3 + $0x10] sm:$0xff]
    %v519 = vld [vmem:[%s3 + $0x18] sm:$0xff]
    %v520 = vand.u32 2147483647, %v516
    %v521 = vand.u32 2147483647, %v517
    %v522 = vand.u32 2147483647, %v518
    %v523 = vand.u32 2147483647, %v519
    %v524 = vsel %vm41, %v520, 0.0
    %525 = vadd.xlane.f32.xlu0 %v524
    %v526 = vpop.xlane.xlu0 %525
    %v527 = vsel %vm41, %v521, 0.0
    %528 = vadd.xlane.f32.xlu0 %v527
    %v529 = vpop.xlane.xlu0 %528
    %v530 = vsel %vm41, %v522, 0.0
    %531 = vadd.xlane.f32.xlu0 %v530
    %v532 = vpop.xlane.xlu0 %531
    %v533 = vsel %vm41, %v523, 0.0
    %534 = vadd.xlane.f32.xlu0 %v533
    %v535 = vpop.xlane.xlu0 %534
    %vm536 = vcmp.ne.f32.partialorder %v526, 0.0
    %vm537 = vcmp.ne.f32.partialorder %v529, 0.0
    %vm538 = vcmp.ne.f32.partialorder %v532, 0.0
    %vm539 = vcmp.ne.f32.partialorder %v535, 0.0
    %v540 = vsel %vm536, 1, 0
    %v541 = vsel %vm537, 1, 0
    %v542 = vsel %vm538, 1, 0
    %v543 = vsel %vm539, 1, 0
    %v544 = vcvt.s32.f32 %v540
    %v545 = vcvt.s32.f32 %v541
    %v546 = vcvt.s32.f32 %v542
    %v547 = vcvt.s32.f32 %v543
    %v548 = vmul.f32 %v516, %v544
    %v549 = vmul.f32 %v517, %v545
    %v550 = vmul.f32 %v518, %v546
    %v551 = vmul.f32 %v519, %v547
    %v552 = vsel %vm41, %v548, 0.0
    %v553 = vsel %vm41, %v549, 0.0
    %v554 = vadd.f32 %v552, %v553
    %v555 = vrot.slane %v554, 4
    %v556 = vadd.f32 %v554, %v555
    %v557 = vrot.slane %v556, 2
    %v558 = vadd.f32 %v556, %v557
    %v559 = vrot.slane %v558, 1
    %v560 = vadd.f32 %v558, %v559
    %v561 = vsel %vm41, %v550, 0.0
    %v562 = vsel %vm41, %v551, 0.0
    %v563 = vadd.f32 %v561, %v562
    %v564 = vrot.slane %v563, 4
    %v565 = vadd.f32 %v563, %v564
    %v566 = vrot.slane %v565, 2
    %v567 = vadd.f32 %v565, %v566
    %v568 = vrot.slane %v567, 1
    %v569 = vadd.f32 %v567, %v568
    %v574 = vperm.slane %v544, %v133
    %v575 = vperm.slane %v545, %v135
    %v576 = vsel %vm137, %v575, %v574
    %v577 = vperm.slane %v546, %v133
    %v578 = vperm.slane %v547, %v135
    %v579 = vsel %vm137, %v578, %v577
    %v580 = vsel %vm154, %v579, %v576
    %vm582 = vcmask 123904
    %v583 = vsel %vm582, %v580, 0.0
    %584 = vadd.xlane.f32.xlu0 %v583
    %v585 = vpop.xlane.xlu0 %584
    %v586 = vmax.f32 %v585, 1.0
    %v588 = vrot.slane %v586, 1
    %v591 = vrcp.pop %v586
    %v592 = vmul.f32 %v586, %v591
    %v593 = vsub.f32 1.0, %v592
    %v594 = vmul.f32 %v591, %v593
    %v595 = vadd.f32 %v591, %v594
    %vm596 = vweird.f32 %v586
    %vm597 = vweird.f32 %v591
    %vm598 = vmor %vm596, %vm597
    %v599 = vsel %vm598, %v591, %v595
    %v600 = vand.u32 2147483647, %v586
    %vm601 = vcmp.eq.f32.partialorder %v600, 8.507059e+37
    %v602 = vand.u32 %v586, 2147483648
    %v603 = vor.u32 1.1754944e-38, %v602
    %v604 = vsel %vm601, %v603, %v599
    %v605 = vmul.f32 %v560, %v604
    %v606 = vrcp.pop %v588
    %v607 = vmul.f32 %v588, %v606
    %v608 = vsub.f32 1.0, %v607
    %v609 = vmul.f32 %v606, %v608
    %v610 = vadd.f32 %v606, %v609
    %vm611 = vweird.f32 %v588
    %vm612 = vweird.f32 %v606
    %vm613 = vmor %vm611, %vm612
    %v614 = vsel %vm613, %v606, %v610
    %v615 = vand.u32 2147483647, %v588
    %vm616 = vcmp.eq.f32.partialorder %v615, 8.507059e+37
    %v617 = vand.u32 %v588, 2147483648
    %v618 = vor.u32 1.1754944e-38, %v617
    %v619 = vsel %vm616, %v618, %v614
    %v620 = vmul.f32 %v569, %v619
    %v623 = vrot.slane %v195, 7
    %v624 = vsel %vm154, %v623, %v180
    %626 = vst.msk [vmem:[#allocation2] sm:$0x3] %vm582, %v624
    %v629 = vrot.slane %v355, 7
    %v630 = vsel %vm154, %v629, %v340
    %632 = vst.msk [vmem:[#allocation4] sm:$0x3] %vm582, %v630
    %v635 = vrot.slane %v515, 7
    %v636 = vsel %vm154, %v635, %v500
    %638 = vst.msk [vmem:[#allocation6] sm:$0x3] %vm582, %v636
    %v641 = vrot.slane %v620, 7
    %v642 = vsel %vm154, %v641, %v605
    %644 = vst.msk [vmem:[#allocation7] sm:$0x3] %vm582, %v642
    %v645 = vadd.f32 %v180, %v340
    %v646 = vadd.f32 %v195, %v355
    %v647 = vadd.f32 %v645, %v500
    %v648 = vadd.f32 %v646, %v515
    %v649 = vadd.f32 %v647, %v605
    %v650 = vadd.f32 %v648, %v620
    %v651 = vmul.f32 %v649, 0.25
    %v652 = vmul.f32 %v650, 0.25
    %v655 = vrot.slane %v652, 7
    %v656 = vsel %vm154, %v655, %v651
    %658 = vst.msk [vmem:[#allocation9] sm:$0x3] %vm582, %v656
    // Predicated region
    $region18: #{tpu_custom_call.1} parent=1 // pred_check
      _
    $region19: #{tpu_custom_call.1} parent=1 // pred_check_branch
      %660 = sbr.rel (0) target = $region21
    $region20: #{tpu_custom_call.1} parent=1 // pred_region
      %662 = vsyncadd [#allocation3], 0
      %s664 = sshll.u32 [#allocation2], 4
      %s665 = int_to_ptr.vmem [resolvable:$true] %s664
      %s666 = sshll.u32 %s4, 4
      %s667 = int_to_ptr.hbm [resolvable:$true] %s666
      %669 = dma.vmem_to_hbm [thread:$0]  %s665, 32, %s667, [#allocation3]
    $region21: #{tpu_custom_call.1} parent=1 // pred_fallthru
      _
    // Predicated region
    $region22: #{tpu_custom_call.1} parent=1 // pred_check
      _
    $region23: #{tpu_custom_call.1} parent=1 // pred_check_branch
      %671 = sbr.rel (0) target = $region25
    $region24: #{tpu_custom_call.1} parent=1 // pred_region
      %673 = vsyncadd [#allocation5], 0
      %s675 = sshll.u32 [#allocation4], 4
      %s676 = int_to_ptr.vmem [resolvable:$true] %s675
      %s677 = sshll.u32 %s5, 4
      %s678 = int_to_ptr.hbm [resolvable:$true] %s677
      %680 = dma.vmem_to_hbm [thread:$0]  %s676, 32, %s678, [#allocation5]
    $region25: #{tpu_custom_call.1} parent=1 // pred_fallthru
      _
    // Predicated region
    $region26: #{tpu_custom_call.1} parent=1 // pred_check
      _
    $region27: #{tpu_custom_call.1} parent=1 // pred_check_branch
      %682 = sbr.rel (0) target = $region29
    $region28: #{tpu_custom_call.1} parent=1 // pred_region
      %684 = vsyncadd [#allocation5], 0
      %s686 = sshll.u32 [#allocation6], 4
      %s687 = int_to_ptr.vmem [resolvable:$true] %s686
      %s688 = sshll.u32 %s6, 4
      %s689 = int_to_ptr.hbm [resolvable:$true] %s688
      %691 = dma.vmem_to_hbm [thread:$0]  %s687, 32, %s689, [#allocation5]
    $region29: #{tpu_custom_call.1} parent=1 // pred_fallthru
      _
    // Predicated region
    $region30: #{tpu_custom_call.1} parent=1 // pred_check
      _
    $region31: #{tpu_custom_call.1} parent=1 // pred_check_branch
      %693 = sbr.rel (0) target = $region33
    $region32: #{tpu_custom_call.1} parent=1 // pred_region
      %695 = vsyncadd [#allocation8], 0
      %s697 = sshll.u32 [#allocation7], 4
      %s698 = int_to_ptr.vmem [resolvable:$true] %s697
      %s699 = sshll.u32 %s7, 4
      %s700 = int_to_ptr.hbm [resolvable:$true] %s699
      %702 = dma.vmem_to_hbm [thread:$0]  %s698, 32, %s700, [#allocation8]
    $region33: #{tpu_custom_call.1} parent=1 // pred_fallthru
      _
    // Predicated region
    $region34: #{tpu_custom_call.1} parent=1 // pred_check
      _
    $region35: #{tpu_custom_call.1} parent=1 // pred_check_branch
      %704 = sbr.rel (0) target = $region37
    $region36: #{tpu_custom_call.1} parent=1 // pred_region
      %706 = vsyncadd [#allocation8], 0
      %s708 = sshll.u32 [#allocation9], 4
      %s709 = int_to_ptr.vmem [resolvable:$true] %s708
      %s710 = sshll.u32 %s8, 4
      %s711 = int_to_ptr.hbm [resolvable:$true] %s710
      %713 = dma.vmem_to_hbm [thread:$0]  %s709, 32, %s711, [#allocation8]
    $region37: #{tpu_custom_call.1} parent=1 // pred_fallthru
      _
    // Predicated region
    $region38: #{tpu_custom_call.1} parent=1 // pred_check
      _
    $region39: #{tpu_custom_call.1} parent=1 // pred_check_branch
      %715 = sbr.rel (0) target = $region41
    $region40: #{tpu_custom_call.1} parent=1 // pred_region
      %717 = dma.done [#allocation3], 32
    $region41: #{tpu_custom_call.1} parent=1 // pred_fallthru
      _
    // Predicated region
    $region42: #{tpu_custom_call.1} parent=1 // pred_check
      _
    $region43: #{tpu_custom_call.1} parent=1 // pred_check_branch
      %719 = sbr.rel (0) target = $region45
    $region44: #{tpu_custom_call.1} parent=1 // pred_region
      %721 = dma.done [#allocation5], 32
    $region45: #{tpu_custom_call.1} parent=1 // pred_fallthru
      _
    // Predicated region
    $region46: #{tpu_custom_call.1} parent=1 // pred_check
      _
    $region47: #{tpu_custom_call.1} parent=1 // pred_check_branch
      %723 = sbr.rel (0) target = $region49
    $region48: #{tpu_custom_call.1} parent=1 // pred_region
      %725 = dma.done [#allocation5], 32
    $region49: #{tpu_custom_call.1} parent=1 // pred_fallthru
      _
    // Predicated region
    $region50: #{tpu_custom_call.1} parent=1 // pred_check
      _
    $region51: #{tpu_custom_call.1} parent=1 // pred_check_branch
      %727 = sbr.rel (0) target = $region53
    $region52: #{tpu_custom_call.1} parent=1 // pred_region
      %729 = dma.done [#allocation8], 32
    $region53: #{tpu_custom_call.1} parent=1 // pred_fallthru
      _
    // Predicated region
    $region54: #{tpu_custom_call.1} parent=1 // pred_check
      _
    $region55: #{tpu_custom_call.1} parent=1 // pred_check_branch
      %731 = sbr.rel (0) target = $region57
    $region56: #{tpu_custom_call.1} parent=1 // pred_region
      %733 = dma.done [#allocation8], 32
    $region57: #{tpu_custom_call.1} parent=1 // pred_fallthru
      _
    %734 = vsyncpa [#allocation3], 1
    %735 = vsyncpa [#allocation5], 1
    %736 = vsyncpa [#allocation8], 1

</llo_original>
